<compile_context>
chip_gen: v6e
topology: v6e:2x2x1
jax: 0.10.0
libtpu: 0.0.40
codegen_flags: <defaults>
</compile_context>

<pallas_src>
import jax
import jax.numpy as jnp
from jax.experimental import pallas as pl
from jax.experimental.pallas import tpu as pltpu

RANK = 3        # low-rank factor count
FEAT = 128      # text_in == audio_in == 128
OUT_DIM = 1     # module output_dim
RL = 8          # rank lanes: rank (3) + bias lane (1), zero-padded to 8


# ---------------------------------------------------------------------------
# Pallas kernel: the entire LMF forward, fused.
# ---------------------------------------------------------------------------
def lmf_kernel(slab_ref, text_ref, audio_ref, o_ref):
    params = slab_ref[...]                    # (2, FEAT+1, RL) fp32, ~8 KiB
    aw = params[0, :FEAT, :]                  # (FEAT, RL) audio weights * w_r
    ac = params[0, FEAT:, :]                  # (1, RL)    audio const  * w_r (+bias lane)
    tw = params[1, :FEAT, :]                  # (FEAT, RL) text weights
    tc = params[1, FEAT:, :]                  # (1, RL)    text const   (+ones lane)

    # Sequence means (fused; f32 accumulation).
    audio_h = jnp.mean(audio_ref[...], axis=1)            # (BT, FEAT)
    text_h = jnp.mean(text_ref[...], axis=1)               # (BT, FEAT)

    # Low-rank projections.  The torch "[1, h]" concatenation is folded into
    # the constant row; fusion_weights are folded into the audio columns and
    # fusion_bias rides an extra lane (audio=bias, text=1).
    fa = jnp.dot(audio_h, aw, preferred_element_type=jnp.float32) + ac   # (BT, RL)
    ft = jnp.dot(text_h, tw, preferred_element_type=jnp.float32) + tc    # (BT, RL)

    # Rank contraction (+ bias via the extra lane): cross-lane reduce on XLU.
    out = jnp.sum(fa * ft, axis=-1, keepdims=True)                       # (BT, 1)
    o_ref[...] = out.astype(o_ref.dtype)


# ---------------------------------------------------------------------------
# One-time parameter packing (NOT per forward call)
# ---------------------------------------------------------------------------
def prepare_params(params):
    """Pack torch-layout LMF params into one small kernel-friendly slab.

    slab[0] : audio factor, columns scaled by fusion_weights; lane RANK of the
              constant row carries fusion_bias.
    slab[1] : text factor; lane RANK of the constant row carries 1.0.
    Rows 0..FEAT-1 are the weight rows, row FEAT is the constant ("+1") row.
    """
    audio_factor, text_factor, fusion_weights, fusion_bias = params
    w = fusion_weights[0, :]                                     # (rank,)
    slab = jnp.zeros((2, FEAT + 1, RL), jnp.float32)
    slab = slab.at[0, :FEAT, :RANK].set(audio_factor[:, 1:, 0].T * w[None, :])
    slab = slab.at[0, FEAT, :RANK].set(audio_factor[:, 0, 0] * w)
    slab = slab.at[1, :FEAT, :RANK].set(text_factor[:, 1:, 0].T)
    slab = slab.at[1, FEAT, :RANK].set(text_factor[:, 0, 0])
    # bias fold: extra "rank" lane contributes bias * 1 to the lane sum.
    slab = slab.at[0, FEAT, RANK].set(fusion_bias[0, 0])
    slab = slab.at[1, FEAT, RANK].set(1.0)
    return slab


# ---------------------------------------------------------------------------
# Forward wrapper
# ---------------------------------------------------------------------------
@jax.jit
def lmf_forward(text_x, audio_x, slab):
    """text_x, audio_x: (B, seq, 128) float32.  Returns (B, 1)."""
    B, S, F = text_x.shape
    # Batch tile: full batch when small, otherwise 256-row (multiple-of-8)
    # tiles so activations are double-buffered and VMEM stays bounded
    # (2 inputs x 2 buffers x 256 x S x 512 B — well inside v7x's 64 MiB).
    BT = B if B <= 256 else 256
    grid = (pl.cdiv(B, BT),)

    out = pl.pallas_call(
        lmf_kernel,
        out_shape=jax.ShapeDtypeStruct((B, OUT_DIM), jnp.float32),
        grid_spec=pltpu.PrefetchScalarGridSpec(
            num_scalar_prefetch=0,
            grid=grid,
            in_specs=[
                pl.BlockSpec((2, FEAT + 1, RL), lambda b: (0, 0, 0)),  # param slab
                pl.BlockSpec((BT, S, F), lambda b: (b, 0, 0)),         # text_x
                pl.BlockSpec((BT, S, F), lambda b: (b, 0, 0)),         # audio_x
            ],
            out_specs=pl.BlockSpec((BT, OUT_DIM), lambda b: (b, 0)),
        ),
        compiler_params=pltpu.CompilerParams(
            dimension_semantics=("parallel",)),
    )(slab, text_x, audio_x)

    return out


# ---------------------------------------------------------------------------
# Deterministic parameter init (xavier-normal style, bias = 0 as in the module)
# ---------------------------------------------------------------------------
def init_params(key):
    k1, k2, k3 = jax.random.split(key, 3)

    def xavier_normal(key, shape):
        fan_out = shape[0] * shape[2]
        fan_in = shape[1] * shape[2]
        std = (2.0 / (fan_in + fan_out)) ** 0.5
        return std * jax.random.normal(key, shape, jnp.float32)

    audio_factor = xavier_normal(k1, (RANK, FEAT + 1, OUT_DIM))
    text_factor = xavier_normal(k2, (RANK, FEAT + 1, OUT_DIM))
    fw_std = (2.0 / (1 + RANK)) ** 0.5
    fusion_weights = fw_std * jax.random.normal(k3, (1, RANK), jnp.float32)
    fusion_bias = jnp.zeros((1, OUT_DIM), jnp.float32)   # .fill_(0) in the module
    return audio_factor, text_factor, fusion_weights, fusion_bias


# ---------------------------------------------------------------------------
# Plain-JAX reference (mirrors the torch forward exactly)
# ---------------------------------------------------------------------------
def lmf_reference(text_x, audio_x, params):
    audio_factor, text_factor, fusion_weights, fusion_bias = params
    audio_h = jnp.mean(audio_x, axis=1)
    text_h = jnp.mean(text_x, axis=1)
    B = audio_h.shape[0]
    ones = jnp.ones((B, 1), audio_h.dtype)
    _a = jnp.concatenate([ones, audio_h], axis=1)                 # (B, 129)
    _t = jnp.concatenate([ones, text_h], axis=1)                  # (B, 129)
    fusion_audio = jnp.einsum('bi,rio->rbo', _a, audio_factor)    # (rank, B, 1)
    fusion_text = jnp.einsum('bi,rio->rbo', _t, text_factor)      # (rank, B, 1)
    zy = fusion_audio * fusion_text
    out = jnp.einsum('xr,bro->bxo', fusion_weights,
                     jnp.transpose(zy, (1, 0, 2)))                # (B, 1, 1)
    return out.reshape(B, OUT_DIM) + fusion_bias


if __name__ == "__main__":
    key = jax.random.PRNGKey(0)
    kp, kt, ka = jax.random.split(key, 3)

    B, seq = 2, 8
    text_x = jax.random.normal(kt, (B, seq, FEAT), jnp.float32)
    audio_x = jax.random.normal(ka, (B, seq, FEAT), jnp.float32)

    params = init_params(kp)
    slab = prepare_params(params)    # packed once, reused for every call

    out = jax.block_until_ready(lmf_forward(text_x, audio_x, slab))
    ref = jax.block_until_ready(lmf_reference(text_x, audio_x, params))

    assert out.shape == (B, OUT_DIM), out.shape
    assert jnp.allclose(out, ref, atol=1e-4, rtol=1e-4), (out, ref)

    print("KERNEL_OK")
</pallas_src>

<mosaic_0001>
module attributes {stable_mosaic.version = 11 : i64} {
  func.func @lmf_kernel(%arg0: i32, %arg1: memref<2x129x8xf32, #tpu.memory_space<vmem>>, %arg2: memref<2x8x128xf32, #tpu.memory_space<vmem>>, %arg3: memref<2x8x128xf32, #tpu.memory_space<vmem>>, %arg4: memref<2x1xf32, #tpu.memory_space<vmem>>) attributes {dimension_semantics = [#tpu.dimension_semantics<parallel>], iteration_bounds = array<i64: 1>, scalar_prefetch = 0 : i64, scratch_operands = 0 : i64, tpu.core_type = #tpu.core_type<tc>, window_params = [{pipeline_mode = #tpu.pipeline_mode<synchronous>, transform_indices = @transform_0, window_bounds = array<i64: 2, 129, 8>}, {transform_indices = @transform_1, window_bounds = array<i64: 2, 8, 128>}, {transform_indices = @transform_2, window_bounds = array<i64: 2, 8, 128>}, {transform_indices = @transform_3, window_bounds = array<i64: 2, 1>}]} {
    %c0 = arith.constant 0 : index
    %c0_0 = arith.constant 0 : index
    %c0_1 = arith.constant 0 : index
    %0 = vector.load %arg1[%c0, %c0_0, %c0_1] : memref<2x129x8xf32, #tpu.memory_space<vmem>>, vector<2x129x8xf32>
    %1 = vector.extract_strided_slice %0 {offsets = [0, 0, 0], sizes = [1, 128, 8], strides = [1, 1, 1]} : vector<2x129x8xf32> to vector<1x128x8xf32>
    %2 = vector.shape_cast %1 : vector<1x128x8xf32> to vector<128x8xf32>
    %3 = vector.extract_strided_slice %0 {offsets = [0, 128, 0], sizes = [1, 1, 8], strides = [1, 1, 1]} : vector<2x129x8xf32> to vector<1x1x8xf32>
    %4 = vector.shape_cast %3 : vector<1x1x8xf32> to vector<1x8xf32>
    %5 = vector.extract_strided_slice %0 {offsets = [1, 0, 0], sizes = [1, 128, 8], strides = [1, 1, 1]} : vector<2x129x8xf32> to vector<1x128x8xf32>
    %6 = vector.shape_cast %5 : vector<1x128x8xf32> to vector<128x8xf32>
    %7 = vector.extract_strided_slice %0 {offsets = [1, 128, 0], sizes = [1, 1, 8], strides = [1, 1, 1]} : vector<2x129x8xf32> to vector<1x1x8xf32>
    %8 = vector.shape_cast %7 : vector<1x1x8xf32> to vector<1x8xf32>
    %c0_2 = arith.constant 0 : index
    %c0_3 = arith.constant 0 : index
    %c0_4 = arith.constant 0 : index
    %9 = vector.load %arg3[%c0_2, %c0_3, %c0_4] : memref<2x8x128xf32, #tpu.memory_space<vmem>>, vector<2x8x128xf32>
    %cst = arith.constant dense<0.000000e+00> : vector<2x128xf32>
    %10 = vector.multi_reduction <add>, %9, %cst [1] : vector<2x8x128xf32> to vector<2x128xf32>
    %cst_5 = arith.constant 8.000000e+00 : f32
    %11 = vector.broadcast %cst_5 : f32 to vector<2x128xf32>
    %12 = arith.divf %10, %11 : vector<2x128xf32>
    %c0_6 = arith.constant 0 : index
    %c0_7 = arith.constant 0 : index
    %c0_8 = arith.constant 0 : index
    %13 = vector.load %arg2[%c0_6, %c0_7, %c0_8] : memref<2x8x128xf32, #tpu.memory_space<vmem>>, vector<2x8x128xf32>
    %cst_9 = arith.constant dense<0.000000e+00> : vector<2x128xf32>
    %14 = vector.multi_reduction <add>, %13, %cst_9 [1] : vector<2x8x128xf32> to vector<2x128xf32>
    %cst_10 = arith.constant 8.000000e+00 : f32
    %15 = vector.broadcast %cst_10 : f32 to vector<2x128xf32>
    %16 = arith.divf %14, %15 : vector<2x128xf32>
    %cst_11 = arith.constant dense<0.000000e+00> : vector<2x8xf32>
    %17 = tpu.matmul %12, %2, %cst_11 {dimension_numbers = #tpu.dot_dimension_numbers<[1], [0], [0], [1], [0, 0, 1, 1], [], []>} : vector<2x128xf32>, vector<128x8xf32>, vector<2x8xf32> -> vector<2x8xf32>
    %18 = vector.broadcast %4 : vector<1x8xf32> to vector<2x8xf32>
    %19 = arith.addf %17, %18 : vector<2x8xf32>
    %cst_12 = arith.constant dense<0.000000e+00> : vector<2x8xf32>
    %20 = tpu.matmul %16, %6, %cst_12 {dimension_numbers = #tpu.dot_dimension_numbers<[1], [0], [0], [1], [0, 0, 1, 1], [], []>} : vector<2x128xf32>, vector<128x8xf32>, vector<2x8xf32> -> vector<2x8xf32>
    %21 = vector.broadcast %8 : vector<1x8xf32> to vector<2x8xf32>
    %22 = arith.addf %20, %21 : vector<2x8xf32>
    %23 = arith.mulf %19, %22 : vector<2x8xf32>
    %cst_13 = arith.constant dense<0.000000e+00> : vector<2xf32>
    %24 = vector.multi_reduction <add>, %23, %cst_13 [1] : vector<2x8xf32> to vector<2xf32>
    %25 = vector.shape_cast %24 : vector<2xf32> to vector<2x1xf32>
    %c0_14 = arith.constant 0 : index
    %c0_15 = arith.constant 0 : index
    %26 = vector.load %arg4[%c0_14, %c0_15] : memref<2x1xf32, #tpu.memory_space<vmem>>, vector<2x1xf32>
    tpu.vector_store %arg4[%c0_14, %c0_15], %25 {strides = array<i32>} : memref<2x1xf32, #tpu.memory_space<vmem>>, vector<2x1xf32>,
    return
  }
  func.func @transform_0(%arg0: i32) -> (i32, i32, i32) {
    %c0_i32 = arith.constant 0 : i32
    %c0_i32_0 = arith.constant 0 : i32
    %c0_i32_1 = arith.constant 0 : i32
    %c0_i32_2 = arith.constant 0 : i32
    return %c0_i32, %c0_i32_0, %c0_i32_1 : i32, i32, i32
  }
  func.func @transform_1(%arg0: i32) -> (i32, i32, i32) {
    %c0_i32 = arith.constant 0 : i32
    %c0_i32_0 = arith.constant 0 : i32
    %c0_i32_1 = arith.constant 0 : i32
    return %arg0, %c0_i32, %c0_i32_0 : i32, i32, i32
  }
  func.func @transform_2(%arg0: i32) -> (i32, i32, i32) {
    %c0_i32 = arith.constant 0 : i32
    %c0_i32_0 = arith.constant 0 : i32
    %c0_i32_1 = arith.constant 0 : i32
    return %arg0, %c0_i32, %c0_i32_0 : i32, i32, i32
  }
  func.func @transform_3(%arg0: i32) -> (i32, i32) {
    %c0_i32 = arith.constant 0 : i32
    %c0_i32_0 = arith.constant 0 : i32
    return %arg0, %c0_i32 : i32, i32
  }
}

</mosaic_0001>

<llo_original>
// kernel: lmf_forward.1
$region0: #{lmf_forward.1}
  #allocation0 [shape = 'u32[]', space=smem, size = 0x4, offset = 0x4, fixed_abs, tag = 'smem constant byte address 0x4 - core index']
  #allocation1 [shape = 'u32[144,128]{1,0:T(1,128)}', space=vmem, size = 0x12000, scoped, tag = 'internal scratch']
  %s0 = inlined_call_operand.vmem [shape: f32[2,129,8], index: 0, kind: input, shape index: {}]
  %s1 = inlined_call_operand.vmem [shape: f32[2,8,128], index: 1, kind: input, shape index: {}]
  %s2 = inlined_call_operand.vmem [shape: f32[2,8,128], index: 2, kind: input, shape index: {}]
  %s3 = inlined_call_operand.vmem [shape: f32[2,1], index: 3, kind: output, shape index: {}]
  %s4 = sld [smem:[#allocation0]]
  $region22: #{lmf_forward.1} parent=0
    _
  %s6 = ssub.s32 1, %s4
  %s7 = scalar_select 0, %s6, %s4
  // Predicated region
  $region2: #{lmf_forward.1} parent=0 // pred_check
    _
  $region3: #{lmf_forward.1} parent=0 // pred_check_branch
    %9 = sbr.rel (0) target = $region5
  $region4: #{lmf_forward.1} parent=0 // pred_region
    _
  $region5: #{lmf_forward.1} parent=0 // pred_fallthru
    _
  // Predicated region
  $region6: #{lmf_forward.1} parent=0 // pred_check
    _
  $region7: #{lmf_forward.1} parent=0 // pred_check_branch
    %11 = sbr.rel (0) target = $region9
  $region8: #{lmf_forward.1} parent=0 // pred_region
    _
  $region9: #{lmf_forward.1} parent=0 // pred_fallthru
    _
  // Predicated region
  $region10: #{lmf_forward.1} parent=0 // pred_check
    _
  $region11: #{lmf_forward.1} parent=0 // pred_check_branch
    %13 = sbr.rel (0) target = $region13
  $region12: #{lmf_forward.1} parent=0 // pred_region
    _
  $region13: #{lmf_forward.1} parent=0 // pred_fallthru
    _
  %v14 = vld [vmem:[%s0] sm:$0xff]
  %v15 = vld [vmem:[%s0 + $0x8] sm:$0xff]
  %v16 = vld [vmem:[%s0 + $0x10] sm:$0xff]
  %v17 = vld [vmem:[%s0 + $0x18] sm:$0xff]
  %v18 = vld [vmem:[%s0 + $0x20] sm:$0xff]
  %v19 = vld [vmem:[%s0 + $0x28] sm:$0xff]
  %v20 = vld [vmem:[%s0 + $0x30] sm:$0xff]
  %v21 = vld [vmem:[%s0 + $0x38] sm:$0xff]
  %v22 = vld [vmem:[%s0 + $0x40] sm:$0xff]
  %v23 = vld [vmem:[%s0 + $0x48] sm:$0xff]
  %v24 = vld [vmem:[%s0 + $0x50] sm:$0xff]
  %v25 = vld [vmem:[%s0 + $0x58] sm:$0xff]
  %v26 = vld [vmem:[%s0 + $0x60] sm:$0xff]
  %v27 = vld [vmem:[%s0 + $0x68] sm:$0xff]
  %v28 = vld [vmem:[%s0 + $0x70] sm:$0xff]
  %v29 = vld [vmem:[%s0 + $0x78] sm:$0xff]
  %v30 = vld [vmem:[%s0 + $0x80] sm:$0x1]
  %v31 = vld [vmem:[%s0 + $0x88] sm:$0xff]
  %v32 = vld [vmem:[%s0 + $0x90] sm:$0xff]
  %v33 = vld [vmem:[%s0 + $0x98] sm:$0xff]
  %v34 = vld [vmem:[%s0 + $0xa0] sm:$0xff]
  %v35 = vld [vmem:[%s0 + $0xa8] sm:$0xff]
  %v36 = vld [vmem:[%s0 + $0xb0] sm:$0xff]
  %v37 = vld [vmem:[%s0 + $0xb8] sm:$0xff]
  %v38 = vld [vmem:[%s0 + $0xc0] sm:$0xff]
  %v39 = vld [vmem:[%s0 + $0xc8] sm:$0xff]
  %v40 = vld [vmem:[%s0 + $0xd0] sm:$0xff]
  %v41 = vld [vmem:[%s0 + $0xd8] sm:$0xff]
  %v42 = vld [vmem:[%s0 + $0xe0] sm:$0xff]
  %v43 = vld [vmem:[%s0 + $0xe8] sm:$0xff]
  %v44 = vld [vmem:[%s0 + $0xf0] sm:$0xff]
  %v45 = vld [vmem:[%s0 + $0xf8] sm:$0xff]
  %v46 = vld [vmem:[%s0 + $0x100] sm:$0xff]
  %v47 = vld [vmem:[%s0 + $0x108] sm:$0x1]
  %v48 = vld [vmem:[%s2] sm:$0xff]
  %v49 = vld [vmem:[%s2 + $0x8] sm:$0xff]
  %v50 = vrot.slane %v48, 4
  %v51 = vadd.f32 %v48, %v50
  %v52 = vrot.slane %v51, 2
  %v53 = vadd.f32 %v51, %v52
  %v54 = vrot.slane %v53, 1
  %v55 = vadd.f32 %v53, %v54
  %v56 = vrot.slane %v49, 4
  %v57 = vadd.f32 %v49, %v56
  %v58 = vrot.slane %v57, 2
  %v59 = vadd.f32 %v57, %v58
  %v60 = vrot.slane %v59, 1
  %v61 = vadd.f32 %v59, %v60
  %v62 = vrcp.pop 8.0
  %v63 = vmul.f32 %v55, %v62
  %v64 = vmul.f32 %v61, %v62
  %v65 = vld [vmem:[%s1] sm:$0xff]
  %v66 = vld [vmem:[%s1 + $0x8] sm:$0xff]
  %v67 = vrot.slane %v65, 4
  %v68 = vadd.f32 %v65, %v67
  %v69 = vrot.slane %v68, 2
  %v70 = vadd.f32 %v68, %v69
  %v71 = vrot.slane %v70, 1
  %v72 = vadd.f32 %v70, %v71
  %v73 = vrot.slane %v66, 4
  %v74 = vadd.f32 %v66, %v73
  %v75 = vrot.slane %v74, 2
  %v76 = vadd.f32 %v74, %v75
  %v77 = vrot.slane %v76, 1
  %v78 = vadd.f32 %v76, %v77
  %v79 = vmul.f32 %v72, %v62
  %v80 = vmul.f32 %v78, %v62
  %v81 = vlaneseq
  %v82 = vshrl.u32 %v81, 7
  %v83 = vsub.s32 0, %v82
  %v84 = vrot.slane %v30, %v83
  %vm87 = vcmask 1041409
  %v88 = vsel %vm87, %v64, %v63
  %90 = vmatprep.subr.mxu0 0.0
  %91 = vmatpush1.msra.mxu0 %v29
  %92 = vmatprep.subr.mxu0 0.0
  %93 = vmatpush1.msra.mxu0 %v28
  %94 = vmatprep.subr.mxu0 0.0
  %95 = vmatpush1.msra.mxu0 %v27
  %96 = vmatprep.subr.mxu0 0.0
  %97 = vmatpush1.msra.mxu0 %v26
  %98 = vmatprep.subr.mxu0 0.0
  %99 = vmatpush1.msra.mxu0 %v25
  %100 = vmatprep.subr.mxu0 0.0
  %101 = vmatpush1.msra.mxu0 %v24
  %102 = vmatprep.subr.mxu0 0.0
  %103 = vmatpush1.msra.mxu0 %v23
  %104 = vmatprep.subr.mxu0 0.0
  %105 = vmatpush1.msra.mxu0 %v22
  %106 = vmatprep.subr.mxu0 0.0
  %107 = vmatpush1.msra.mxu0 %v21
  %108 = vmatprep.subr.mxu0 0.0
  %109 = vmatpush1.msra.mxu0 %v20
  %110 = vmatprep.subr.mxu0 0.0
  %111 = vmatpush1.msra.mxu0 %v19
  %112 = vmatprep.subr.mxu0 0.0
  %113 = vmatpush1.msra.mxu0 %v18
  %114 = vmatprep.subr.mxu0 0.0
  %115 = vmatpush1.msra.mxu0 %v17
  %116 = vmatprep.subr.mxu0 0.0
  %117 = vmatpush1.msra.mxu0 %v16
  %118 = vmatprep.subr.mxu0 0.0
  %119 = vmatpush1.msra.mxu0 %v15
  %120 = vmatprep.subr.mxu0 0.0
  %121 = vmatpush1.msra.mxu0 %v14
  %122 = vmatprep.subr.mxu0 0.0
  %123 = vmatpush2.msra.mxu0 0.0
  %124 = vmatprep.subr.mxu0 0.0
  %125 = vmatpush2.msra.mxu0 0.0
  %126 = vmatprep.subr.mxu0 0.0
  %127 = vmatpush2.msra.mxu0 0.0
  %128 = vmatprep.subr.mxu0 0.0
  %129 = vmatpush2.msra.mxu0 0.0
  %130 = vmatprep.subr.mxu0 0.0
  %131 = vmatpush2.msra.mxu0 0.0
  %132 = vmatprep.subr.mxu0 0.0
  %133 = vmatpush2.msra.mxu0 0.0
  %134 = vmatprep.subr.mxu0 0.0
  %135 = vmatpush2.msra.mxu0 0.0
  %136 = vmatprep.subr.mxu0 0.0
  %137 = vmatpush2.msra.mxu0 0.0
  %138 = vmatprep.subr.mxu0 0.0
  %139 = vmatpush2.msra.mxu0 0.0
  %140 = vmatprep.subr.mxu0 0.0
  %141 = vmatpush2.msra.mxu0 0.0
  %142 = vmatprep.subr.mxu0 0.0
  %143 = vmatpush2.msra.mxu0 0.0
  %144 = vmatprep.subr.mxu0 0.0
  %145 = vmatpush2.msra.mxu0 0.0
  %146 = vmatprep.subr.mxu0 0.0
  %147 = vmatpush2.msra.mxu0 0.0
  %148 = vmatprep.subr.mxu0 0.0
  %149 = vmatpush2.msra.mxu0 0.0
  %150 = vmatprep.subr.mxu0 0.0
  %151 = vmatpush2.msra.mxu0 0.0
  %152 = vmatprep.subr.mxu0 0.0
  %153 = vmatpush2.msra.mxu0 0.0
  %154 = vmatprep.mubr.f32.mxu0 0.0
  %155 = vmatmul.mubr.f32.gmra.mxu0 %v88
  %v156 = vpop.f32.mrf.mxu0
  %v157 = vadd.f32 %v84, %v156
  %v158 = vpop.f32.mrf.mxu0
  %159 = vdwg.mxu0
  %v160 = vlaneseq
  %v161 = vshrl.u32 %v160, 7
  %v162 = vsub.s32 0, %v161
  %v163 = vrot.slane %v47, %v162
  %v166 = vsel %vm87, %v80, %v79
  %168 = vmatprep.subr.mxu0 0.0
  %169 = vmatpush1.msra.mxu0 %v46
  %170 = vmatprep.subr.mxu0 0.0
  %171 = vmatpush1.msra.mxu0 %v45
  %172 = vmatprep.subr.mxu0 0.0
  %173 = vmatpush1.msra.mxu0 %v44
  %174 = vmatprep.subr.mxu0 0.0
  %175 = vmatpush1.msra.mxu0 %v43
  %176 = vmatprep.subr.mxu0 0.0
  %177 = vmatpush1.msra.mxu0 %v42
  %178 = vmatprep.subr.mxu0 0.0
  %179 = vmatpush1.msra.mxu0 %v41
  %180 = vmatprep.subr.mxu0 0.0
  %181 = vmatpush1.msra.mxu0 %v40
  %182 = vmatprep.subr.mxu0 0.0
  %183 = vmatpush1.msra.mxu0 %v39
  %184 = vmatprep.subr.mxu0 0.0
  %185 = vmatpush1.msra.mxu0 %v38
  %186 = vmatprep.subr.mxu0 0.0
  %187 = vmatpush1.msra.mxu0 %v37
  %188 = vmatprep.subr.mxu0 0.0
  %189 = vmatpush1.msra.mxu0 %v36
  %190 = vmatprep.subr.mxu0 0.0
  %191 = vmatpush1.msra.mxu0 %v35
  %192 = vmatprep.subr.mxu0 0.0
  %193 = vmatpush1.msra.mxu0 %v34
  %194 = vmatprep.subr.mxu0 0.0
  %195 = vmatpush1.msra.mxu0 %v33
  %196 = vmatprep.subr.mxu0 0.0
  %197 = vmatpush1.msra.mxu0 %v32
  %198 = vmatprep.subr.mxu0 0.0
  %199 = vmatpush1.msra.mxu0 %v31
  %200 = vmatprep.subr.mxu0 0.0
  %201 = vmatpush2.msra.mxu0 0.0
  %202 = vmatprep.subr.mxu0 0.0
  %203 = vmatpush2.msra.mxu0 0.0
  %204 = vmatprep.subr.mxu0 0.0
  %205 = vmatpush2.msra.mxu0 0.0
  %206 = vmatprep.subr.mxu0 0.0
  %207 = vmatpush2.msra.mxu0 0.0
  %208 = vmatprep.subr.mxu0 0.0
  %209 = vmatpush2.msra.mxu0 0.0
  %210 = vmatprep.subr.mxu0 0.0
  %211 = vmatpush2.msra.mxu0 0.0
  %212 = vmatprep.subr.mxu0 0.0
  %213 = vmatpush2.msra.mxu0 0.0
  %214 = vmatprep.subr.mxu0 0.0
  %215 = vmatpush2.msra.mxu0 0.0
  %216 = vmatprep.subr.mxu0 0.0
  %217 = vmatpush2.msra.mxu0 0.0
  %218 = vmatprep.subr.mxu0 0.0
  %219 = vmatpush2.msra.mxu0 0.0
  %220 = vmatprep.subr.mxu0 0.0
  %221 = vmatpush2.msra.mxu0 0.0
  %222 = vmatprep.subr.mxu0 0.0
  %223 = vmatpush2.msra.mxu0 0.0
  %224 = vmatprep.subr.mxu0 0.0
  %225 = vmatpush2.msra.mxu0 0.0
  %226 = vmatprep.subr.mxu0 0.0
  %227 = vmatpush2.msra.mxu0 0.0
  %228 = vmatprep.subr.mxu0 0.0
  %229 = vmatpush2.msra.mxu0 0.0
  %230 = vmatprep.subr.mxu0 0.0
  %231 = vmatpush2.msra.mxu0 0.0
  %232 = vmatprep.mubr.f32.mxu0 0.0
  %233 = vmatmul.mubr.f32.gmra.mxu0 %v166
  %v234 = vpop.f32.mrf.mxu0
  %v235 = vadd.f32 %v163, %v234
  %v236 = vpop.f32.mrf.mxu0
  %237 = vdwg.mxu0
  %v238 = vmul.f32 %v157, %v235
  %vm239 = vcmask 58368
  %v240 = vsel %vm239, %v238, 0.0
  %241 = vadd.xlane.f32.xlu0 %v240
  %v242 = vpop.xlane.xlu0 %241
  %vm243 = vcmask 1024
  %244 = vst.msk [vmem:[%s3] sm:$0x3] %vm243, %v242
  // Predicated region
  $region14: #{lmf_forward.1} parent=0 // pred_check
    _
  $region15: #{lmf_forward.1} parent=0 // pred_check_branch
    %246 = sbr.rel (0) target = $region17
  $region16: #{lmf_forward.1} parent=0 // pred_region
    _
  $region17: #{lmf_forward.1} parent=0 // pred_fallthru
    _
  // Predicated region
  $region18: #{lmf_forward.1} parent=0 // pred_check
    _
  $region19: #{lmf_forward.1} parent=0 // pred_check_branch
    %248 = sbr.rel (0) target = $region21
  $region20: #{lmf_forward.1} parent=0 // pred_region
    _
  $region21: #{lmf_forward.1} parent=0 // pred_fallthru
    _

</llo_original>
